<compile_context>
chip_gen: v5e
topology: v5e:2x2
jax: 0.10.0
libtpu: 0.0.40
codegen_flags: <defaults>
</compile_context>

<pallas_src>
import functools

import jax
import jax.numpy as jnp
import numpy as np
from jax.experimental import pallas as pl
from jax.experimental.pallas import tpu as pltpu


_MAX_TB = 2048          # diminishing returns past this
_TARGET_TILES = 8       # aim for >= 8 grid steps on large B (megacore + pipeline)


def _round_up(x: int, m: int) -> int:
    return ((x + m - 1) // m) * m


@functools.lru_cache(maxsize=None)
def _vmem_config():
    """(vmem_limit_bytes, tile_budget_bytes), chip-aware with a safe fallback."""
    phys = None
    try:
        info = pltpu.get_tpu_info()
        phys = getattr(info, "vmem_capacity_bytes", None)
    except Exception:
        phys = None
    if not phys:
        phys = 64 * 1024 * 1024          # conservative (v7x-sized) fallback
    phys = int(phys)
    vmem_limit = (phys * 3) // 4         # 128 MiB -> 96 MiB ; 64 MiB -> 48 MiB
    tile_budget = (phys * 3) // 8        # 128 MiB -> 48 MiB ; 64 MiB -> 24 MiB
    return vmem_limit, tile_budget


def _pick_tile(B: int, D: int, itemsize: int, loss_type: str, budget: int) -> int:
    """Largest batch tile that keeps 2 double-buffered inputs + live f32 temps in budget,
    while still producing enough grid tiles for megacore / pipelining."""
    d_pad = _round_up(max(D, 1), 128)                     # lane padding to 128
    n_f32_temps = 3 if loss_type == "mse" else 6          # live (TB,D) f32 temps
    bytes_per_row = d_pad * (4 * itemsize + 4 * n_f32_temps)
    tb = budget // max(bytes_per_row, 1)
    # sublane packing: f32 -> 8, bf16 -> 16, int8/fp8 -> 32
    row_mult = max(8, 32 // max(itemsize, 1))
    tb = (int(tb) // row_mult) * row_mult
    tb = max(row_mult, min(tb, _MAX_TB))
    # never tile larger than the (row-rounded) batch itself
    tb = min(tb, _round_up(B, row_mult))
    # keep >= ~_TARGET_TILES tiles when B is big enough (both TCs + pipeline depth)
    tb_split = _round_up(pl.cdiv(B, _TARGET_TILES), row_mult)
    tb = max(row_mult, min(tb, tb_split))
    return tb


def _consistency_kernel(p1_ref, p2_ref, out_ref, *,
                        loss_type: str, inv_temp: float, per_sample_out: bool,
                        tb: int, b_total: int, needs_mask: bool):
    """One batch tile: elementwise mse / kl_div + last-axis reduction.

    Writes either the per-row loss (per_sample_out=True, block (TB, 1)) or the
    tile's partial sum (per_sample_out=False, block (1, 1, 1))."""
    p1 = p1_ref[...].astype(jnp.float32)
    p2 = p2_ref[...].astype(jnp.float32)

    if loss_type == "mse":
        diff = p1 - p2
        per = jnp.sum(diff * diff, axis=-1, keepdims=True)              # (TB, 1)
    else:  # 'kl_div'
        x1 = p1 * inv_temp
        x2 = p2 * inv_temp
        # log_softmax(pred1 / temp) along last dim (numerically stable)
        m1 = jnp.max(x1, axis=-1, keepdims=True)
        lse1 = jnp.log(jnp.sum(jnp.exp(x1 - m1), axis=-1, keepdims=True)) + m1
        logp1 = x1 - lse1
        # softmax(pred2 / temp) along last dim
        m2 = jnp.max(x2, axis=-1, keepdims=True)
        e2 = jnp.exp(x2 - m2)
        s2 = jnp.sum(e2, axis=-1, keepdims=True)
        prob2 = e2 / s2                     # exact: per-row reciprocal is ~free
        logp2 = (x2 - m2) - jnp.log(s2)
        # F.kl_div(input=logp1, target=prob2, log_target=False):
        #   target * (log(target) - input), with 0 where target == 0
        kl = jnp.where(prob2 > 0, prob2 * (logp2 - logp1), 0.0)
        per = jnp.sum(kl, axis=-1, keepdims=True)                       # (TB, 1)

    if needs_mask:
        # Tail tile: rows past B hold garbage (possibly inf/NaN) — select them to 0
        # AFTER the per-row loss is computed.
        row = (jax.lax.broadcasted_iota(jnp.int32, per.shape, 0)
               + pl.program_id(0) * tb)
        per = jnp.where(row < b_total, per, 0.0)

    if per_sample_out:
        out_ref[...] = per
    else:
        out_ref[...] = jnp.sum(per).reshape(1, 1, 1)


def consistency_loss(pred1, pred2, *, reduction: str = "mean",
                     loss_type: str = "mse", temp: float = 1.0):
    """JAX/Pallas equivalent of ConsistencyLoss.forward."""
    if pred1.shape != pred2.shape:
        raise ValueError("Input tensors for consistency loss must have the same shape.")
    if reduction not in ("mean", "sum", "none"):
        raise ValueError(f"Reduction method '{reduction}' not supported.")
    if loss_type not in ("mse", "kl_div"):
        raise ValueError(f"Loss type '{loss_type}' not supported.")

    orig_shape = pred1.shape
    D = int(orig_shape[-1])
    B = int(np.prod(orig_shape[:-1])) if len(orig_shape) > 1 else 1

    # Stream native dtype (no f32-materializing copy in the wrapper).
    p1 = jnp.reshape(pred1, (B, D))
    p2 = jnp.reshape(pred2, (B, D))
    itemsize = max(jnp.dtype(p1.dtype).itemsize, jnp.dtype(p2.dtype).itemsize)

    vmem_limit, tile_budget = _vmem_config()
    TB = _pick_tile(B, D, itemsize, loss_type, tile_budget)
    num_tiles = pl.cdiv(B, TB)
    needs_mask = (B % TB) != 0          # tail tile masked in-kernel (no jnp.pad copy)

    per_sample_out = (reduction == "none")
    kernel = functools.partial(
        _consistency_kernel,
        loss_type=loss_type,
        inv_temp=float(1.0 / temp),
        per_sample_out=per_sample_out,
        tb=TB,
        b_total=B,
        needs_mask=needs_mask,
    )

    if per_sample_out:
        out_shape = jax.ShapeDtypeStruct((B, 1), jnp.float32)
        out_spec = pl.BlockSpec((TB, 1), lambda i: (i, 0))
        out_bytes = B * 4
    else:
        # one partial sum per tile -> each tile owns its output block -> 'parallel' grid
        out_shape = jax.ShapeDtypeStruct((num_tiles, 1, 1), jnp.float32)
        out_spec = pl.BlockSpec((1, 1, 1), lambda i: (i, 0, 0))
        out_bytes = num_tiles * 4

    in_bytes = B * D * (jnp.dtype(p1.dtype).itemsize + jnp.dtype(p2.dtype).itemsize)
    cost = pl.CostEstimate(
        flops=int((3 if loss_type == "mse" else 10) * B * D),
        transcendentals=int(2 * B * D) if loss_type == "kl_div" else 0,
        bytes_accessed=int(in_bytes + out_bytes),
    )

    out = pl.pallas_call(
        kernel,
        out_shape=out_shape,
        grid_spec=pltpu.PrefetchScalarGridSpec(
            num_scalar_prefetch=0,
            grid=(num_tiles,),
            in_specs=[
                pl.BlockSpec((TB, D), lambda i: (i, 0)),
                pl.BlockSpec((TB, D), lambda i: (i, 0)),
            ],
            out_specs=out_spec,
        ),
        compiler_params=pltpu.CompilerParams(
            dimension_semantics=("parallel",),      # independent tiles -> both TCs on v7x
            vmem_limit_bytes=vmem_limit,
        ),
        cost_estimate=cost,
    )(p1, p2)

    if per_sample_out:
        per = out[:, 0]
        return per.reshape(orig_shape[:-1]) if len(orig_shape) > 1 else per.reshape(())
    total = jnp.sum(out)
    if reduction == "mean":
        return total / jnp.float32(B)
    return total


def _reference(pred1, pred2, *, reduction, loss_type, temp):
    p1 = jnp.asarray(pred1, jnp.float32)
    p2 = jnp.asarray(pred2, jnp.float32)
    if loss_type == "mse":
        per = jnp.sum((p1 - p2) ** 2, axis=-1)
    else:
        logp1 = jax.nn.log_softmax(p1 / temp, axis=-1)
        prob2 = jax.nn.softmax(p2 / temp, axis=-1)
        kl = prob2 * (jnp.log(prob2) - logp1)
        per = jnp.sum(kl, axis=-1)
    if reduction == "mean":
        return per.mean()
    elif reduction == "sum":
        return per.sum()
    return per


if __name__ == "__main__":
    key = jax.random.PRNGKey(0)
    k1, k2 = jax.random.split(key)

    ok = True

    # shape 1: batch=2, seq=8, classes/features=32 (B=16, exact multiple of the tile)
    # shape 2: batch=3, seq=5, classes/features=32 (B=15, exercises the in-kernel tail mask)
    for shape in ((2, 8, 32), (3, 5, 32)):
        pred1 = jax.random.normal(k1, shape, dtype=jnp.float32)
        pred2 = jax.random.normal(k2, shape, dtype=jnp.float32)
        for loss_type in ("mse", "kl_div"):
            for reduction in ("mean", "sum", "none"):
                out = consistency_loss(pred1, pred2, reduction=reduction,
                                       loss_type=loss_type, temp=1.0)
                out = jax.block_until_ready(out)
                ref = _reference(pred1, pred2, reduction=reduction,
                                 loss_type=loss_type, temp=1.0)
                rtol = 1e-5 if loss_type == "mse" else 1e-4
                atol = 1e-6 if loss_type == "mse" else 1e-6
                if not np.allclose(np.asarray(out), np.asarray(ref), rtol=rtol, atol=atol):
                    ok = False
                    print(f"MISMATCH shape={shape} loss_type={loss_type} "
                          f"reduction={reduction}: {np.asarray(out)} vs {np.asarray(ref)}")

    # temperature check for kl_div
    shape = (2, 8, 32)
    pred1 = jax.random.normal(k1, shape, dtype=jnp.float32)
    pred2 = jax.random.normal(k2, shape, dtype=jnp.float32)
    out_t = jax.block_until_ready(
        consistency_loss(pred1, pred2, reduction="mean", loss_type="kl_div", temp=2.0))
    ref_t = _reference(pred1, pred2, reduction="mean", loss_type="kl_div", temp=2.0)
    if not np.allclose(np.asarray(out_t), np.asarray(ref_t), rtol=1e-4, atol=1e-6):
        ok = False
        print(f"MISMATCH kl_div temp=2.0: {np.asarray(out_t)} vs {np.asarray(ref_t)}")

    # native-dtype (bf16) streaming smoke test: kernel casts to f32 internally
    p1_bf = pred1.astype(jnp.bfloat16)
    p2_bf = pred2.astype(jnp.bfloat16)
    out_bf = jax.block_until_ready(
        consistency_loss(p1_bf, p2_bf, reduction="mean", loss_type="mse", temp=1.0))
    ref_bf = _reference(p1_bf, p2_bf, reduction="mean", loss_type="mse", temp=1.0)
    if not np.allclose(np.asarray(out_bf), np.asarray(ref_bf), rtol=1e-3, atol=1e-4):
        ok = False
        print(f"MISMATCH bf16 mse mean: {np.asarray(out_bf)} vs {np.asarray(ref_bf)}")

    if ok:
        print("KERNEL_OK")
</pallas_src>

<mosaic_0001>
module attributes {stable_mosaic.version = 11 : i64} {
  func.func @_consistency_kernel(%arg0: i32, %arg1: memref<8x32xf32, #tpu.memory_space<vmem>>, %arg2: memref<8x32xf32, #tpu.memory_space<vmem>>, %arg3: memref<1x1x1xf32, #tpu.memory_space<vmem>>) attributes {dimension_semantics = [#tpu.dimension_semantics<parallel>], iteration_bounds = array<i64: 2>, scalar_prefetch = 0 : i64, scratch_operands = 0 : i64, tpu.core_type = #tpu.core_type<tc>, window_params = [{transform_indices = @transform_0, window_bounds = array<i64: 8, 32>}, {transform_indices = @transform_1, window_bounds = array<i64: 8, 32>}, {transform_indices = @transform_2, window_bounds = array<i64: 1, 1, 1>}]} {
    %c0 = arith.constant 0 : index
    %c0_0 = arith.constant 0 : index
    %0 = vector.load %arg1[%c0, %c0_0] : memref<8x32xf32, #tpu.memory_space<vmem>>, vector<8x32xf32>
    %c0_1 = arith.constant 0 : index
    %c0_2 = arith.constant 0 : index
    %1 = vector.load %arg2[%c0_1, %c0_2] : memref<8x32xf32, #tpu.memory_space<vmem>>, vector<8x32xf32>
    %2 = arith.subf %0, %1 : vector<8x32xf32>
    %3 = arith.mulf %2, %2 : vector<8x32xf32>
    %cst = arith.constant dense<0.000000e+00> : vector<8xf32>
    %4 = vector.multi_reduction <add>, %3, %cst [1] : vector<8x32xf32> to vector<8xf32>
    %5 = vector.shape_cast %4 : vector<8xf32> to vector<8x1xf32>
    %6 = vector.shape_cast %5 : vector<8x1xf32> to vector<1x8x1xf32>
    %cst_3 = arith.constant dense<0.000000e+00> : vector<1xf32>
    %7 = vector.multi_reduction <add>, %6, %cst_3 [1, 2] : vector<1x8x1xf32> to vector<1xf32>
    %8 = vector.shape_cast %7 : vector<1xf32> to vector<1x1x1xf32>
    %9 = vector.extract %8[0, 0, 0] : f32 from vector<1x1x1xf32>
    %10 = vector.broadcast %9 : f32 to vector<1x1x1xf32>
    %c0_4 = arith.constant 0 : index
    %c0_5 = arith.constant 0 : index
    %c0_6 = arith.constant 0 : index
    %11 = vector.load %arg3[%c0_4, %c0_5, %c0_6] : memref<1x1x1xf32, #tpu.memory_space<vmem>>, vector<1x1x1xf32>
    tpu.vector_store %arg3[%c0_4, %c0_5, %c0_6], %10 {strides = array<i32>} : memref<1x1x1xf32, #tpu.memory_space<vmem>>, vector<1x1x1xf32>,
    return
  }
  func.func @transform_0(%arg0: i32) -> (i32, i32) {
    %c0_i32 = arith.constant 0 : i32
    %c0_i32_0 = arith.constant 0 : i32
    return %arg0, %c0_i32 : i32, i32
  }
  func.func @transform_1(%arg0: i32) -> (i32, i32) {
    %c0_i32 = arith.constant 0 : i32
    %c0_i32_0 = arith.constant 0 : i32
    return %arg0, %c0_i32 : i32, i32
  }
  func.func @transform_2(%arg0: i32) -> (i32, i32, i32) {
    %c0_i32 = arith.constant 0 : i32
    %c0_i32_0 = arith.constant 0 : i32
    %c0_i32_1 = arith.constant 0 : i32
    return %arg0, %c0_i32, %c0_i32_0 : i32, i32, i32
  }
}

</mosaic_0001>

<llo_original>
// kernel: tpu_custom_call.1
$region0: #{tpu_custom_call.1}
  #allocation0 [shape = 'u32[]', space=smem, size = 0x4, offset = 0x4, fixed_abs, tag = 'smem constant byte address 0x4 - core index']
  #allocation1 [shape = 'u32[72,128]{1,0:T(1,128)}', space=vmem, size = 0x9000, scoped, tag = 'internal scratch']
  %s0 = inlined_call_operand.hbm [shape: f32[16,32], index: 0, kind: input, shape index: {}]
  %s1 = inlined_call_operand.hbm [shape: f32[16,32], index: 1, kind: input, shape index: {}]
  %s2 = inlined_call_operand.vmem [shape: f32[2,1,1], index: 2, kind: output, shape index: {}]
  %s3 = sld [smem:[#allocation0]]
  $region49: #{tpu_custom_call.1} parent=0
    _
  %s5 = ssub.s32 1, %s3
  %s6 = scalar_select 0, %s5, %s3
  $region1: #{tpu_custom_call.1} parent=0
    #allocation2 [shape = 'u8[8192]{0}', space=vmem, size = 0x2000, scoped, tag = 'input window, operand 0']
    #allocation3 [shape = 's32[2]{0}', space=sflag, size = 0x8, scoped, tag = 'scoped memory for tpu_custom_call.1']
    #allocation4 [shape = 'u8[8192]{0}', space=vmem, size = 0x2000, scoped, tag = 'input window, operand 1']
    #allocation5 [shape = 's32[2]{0}', space=sflag, size = 0x8, scoped, tag = 'scoped memory for tpu_custom_call.1']
    %7 = vsyncpa [#allocation3], 0
    %s8 = scalar_lea.sflag [#allocation3], 1
    %9 = vsyncpa %s8, 0
    %10 = vsyncpa [#allocation5], 0
    %s11 = scalar_lea.sflag [#allocation5], 1
    %12 = vsyncpa %s11, 0
    loop: start=0, step=1, limit=4
    $region2: #{tpu_custom_call.1} parent=1 // loop_pre_header
      _
    $region3: #{tpu_custom_call.1} parent=1 // loop_header
      %s14 = sphi 0, %s18
      %p15 = scmp.ge.s32.totalorder %s14, 4
      %s24 = sphi 0, %s26
      %s27 = sphi 0, %s24
      %s28 = sphi 0, %s27
      %s44 = sphi 0, %s28
      %s50 = sphi 0, %s52
      %s53 = sphi 0, %s50
      %s54 = sphi 0, %s53
      %s70 = sphi 0, %s54
      %s76 = sphi 0, %s78
      %s79 = sphi 0, %s76
      %s80 = sphi 0, %s79
      %s96 = sphi 0, %s80
    $region4: #{tpu_custom_call.1} parent=1 // loop_header_branch
      %17 = sbr.rel (%p15) target = $region8
    $region5: #{tpu_custom_call.1} parent=1 // loop_body
      %s19 = ssub.s32 %s14, 1
      %s20 = ssub.s32 %s14, 2
      %s21 = sadd.s32 %s14, 1
      %s22 = ssub.s32 %s14, %s21
      %p23 = scmp.eq.s32.totalorder %s22, 0
      %s25 = sadd.s32 %s24, 1
      %s26 = scalar_select %p23, %s24, %s25
      %p29 = pneg %p23
      %p30 = scmp.eq.s32.totalorder %s14, 1
      %p31 = por %p29, %p30
      %p32 = scmp.ne.s32.totalorder %s24, %s27
      %p33 = scmp.eq.s32.totalorder %s14, 0
      %p34 = por %p32, %p33
      %p35 = scmp.ne.s32.totalorder %s24, %s27
      %p36 = scmp.eq.s32.totalorder %s19, 1
      %p37 = por %p35, %p36
      %p38 = scmp.ne.s32.totalorder %s27, %s28
      %p39 = scmp.eq.s32.totalorder %s19, 0
      %p40 = por %p38, %p39
      %p41 = scmp.ne.s32.totalorder %s27, %s28
      %p42 = scmp.eq.s32.totalorder %s20, 1
      %p43 = por %p41, %p42
      %p45 = scmp.ne.s32.totalorder %s28, %s44
      %p46 = scmp.eq.s32.totalorder %s20, 0
      %p47 = por %p45, %p46
      %s48 = ssub.s32 %s14, %s21
      %p49 = scmp.eq.s32.totalorder %s48, 0
      %s51 = sadd.s32 %s50, 1
      %s52 = scalar_select %p49, %s50, %s51
      %p55 = pneg %p49
      %p56 = scmp.eq.s32.totalorder %s14, 1
      %p57 = por %p55, %p56
      %p58 = scmp.ne.s32.totalorder %s50, %s53
      %p59 = scmp.eq.s32.totalorder %s14, 0
      %p60 = por %p58, %p59
      %p61 = scmp.ne.s32.totalorder %s50, %s53
      %p62 = scmp.eq.s32.totalorder %s19, 1
      %p63 = por %p61, %p62
      %p64 = scmp.ne.s32.totalorder %s53, %s54
      %p65 = scmp.eq.s32.totalorder %s19, 0
      %p66 = por %p64, %p65
      %p67 = scmp.ne.s32.totalorder %s53, %s54
      %p68 = scmp.eq.s32.totalorder %s20, 1
      %p69 = por %p67, %p68
      %p71 = scmp.ne.s32.totalorder %s54, %s70
      %p72 = scmp.eq.s32.totalorder %s20, 0
      %p73 = por %p71, %p72
      %s74 = ssub.s32 %s14, %s21
      %p75 = scmp.eq.s32.totalorder %s74, 0
      %s77 = sadd.s32 %s76, 1
      %s78 = scalar_select %p75, %s76, %s77
      %p81 = pneg %p75
      %p82 = scmp.eq.s32.totalorder %s14, 1
      %p83 = por %p81, %p82
      %p84 = scmp.ne.s32.totalorder %s76, %s79
      %p85 = scmp.eq.s32.totalorder %s14, 0
      %p86 = por %p84, %p85
      %p87 = scmp.ne.s32.totalorder %s76, %s79
      %p88 = scmp.eq.s32.totalorder %s19, 1
      %p89 = por %p87, %p88
      %p90 = scmp.ne.s32.totalorder %s79, %s80
      %p91 = scmp.eq.s32.totalorder %s19, 0
      %p92 = por %p90, %p91
      %p93 = scmp.ne.s32.totalorder %s79, %s80
      %p94 = scmp.eq.s32.totalorder %s20, 1
      %p95 = por %p93, %p94
      %p97 = scmp.ne.s32.totalorder %s80, %s96
      %p98 = scmp.eq.s32.totalorder %s20, 0
      %p99 = por %p97, %p98
      %p100 = scmp.le.s32.totalorder 1, %s14
      %p101 = scmp.lt.s32.totalorder %s14, 3
      %p102 = pnand %p100, %p101
      %p103 = pneg %p102
      // Predicated region
      $region9: #{tpu_custom_call.1} parent=5 // pred_check
        _
      $region10: #{tpu_custom_call.1} parent=5 // pred_check_branch
        %105 = sbr.rel (%p102) target = $region12
      $region11: #{tpu_custom_call.1} parent=5 // pred_region
        %s106 = ssub.s32 %s14, 1
      $region12: #{tpu_custom_call.1} parent=5 // pred_fallthru
        _
      %p107 = scmp.lt.s32.totalorder %s14, 2
      // Predicated region
      $region13: #{tpu_custom_call.1} parent=5 // pred_check
        %p108 = pneg %p107
      $region14: #{tpu_custom_call.1} parent=5 // pred_check_branch
        %110 = sbr.rel (%p108) target = $region16
      $region15: #{tpu_custom_call.1} parent=5 // pred_region
        // Predicated region
        $region17: #{tpu_custom_call.1} parent=15 // pred_check
          %p111 = pneg %p34
        $region18: #{tpu_custom_call.1} parent=15 // pred_check_branch
          %113 = sbr.rel (%p111) target = $region20
        $region19: #{tpu_custom_call.1} parent=15 // pred_region
          %s114 = sand.u32 %s24, 1
          %s115 = scalar_lea.sflag [#allocation3], %s114
          %s116 = sand.u32 %s24, 1
          %s117 = smul.addr %s116, 8
          %s118 = scalar_lea.vmem [#allocation2], %s117
          %120 = vsyncadd %s115, 0
          %s121 = smul.addr %s14, 8
          %s122 = scalar_lea.hbm %s0, %s121
          %s124 = sshll.u32 %s122, 4
          %s125 = int_to_ptr.hbm [resolvable:$true] %s124
          %s126 = sshll.u32 %s118, 4
          %s127 = int_to_ptr.vmem [resolvable:$true] %s126
          %129 = dma.hbm_to_vmem [thread:$0]  %s125, 128, %s127, %s115
        $region20: #{tpu_custom_call.1} parent=15 // pred_fallthru
          _
        // Predicated region
        $region21: #{tpu_custom_call.1} parent=15 // pred_check
          %p130 = pneg %p60
        $region22: #{tpu_custom_call.1} parent=15 // pred_check_branch
          %132 = sbr.rel (%p130) target = $region24
        $region23: #{tpu_custom_call.1} parent=15 // pred_region
          %s133 = sand.u32 %s50, 1
          %s134 = scalar_lea.sflag [#allocation5], %s133
          %s135 = sand.u32 %s50, 1
          %s136 = smul.addr %s135, 8
          %s137 = scalar_lea.vmem [#allocation4], %s136
          %139 = vsyncadd %s134, 0
          %s140 = smul.addr %s14, 8
          %s141 = scalar_lea.hbm %s1, %s140
          %s143 = sshll.u32 %s141, 4
          %s144 = int_to_ptr.hbm [resolvable:$true] %s143
          %s145 = sshll.u32 %s137, 4
          %s146 = int_to_ptr.vmem [resolvable:$true] %s145
          %148 = dma.hbm_to_vmem [thread:$0]  %s144, 128, %s146, %s134
        $region24: #{tpu_custom_call.1} parent=15 // pred_fallthru
          _
      $region16: #{tpu_custom_call.1} parent=5 // pred_fallthru
        _
      %p149 = scmp.le.s32.totalorder 1, %s14
      %p150 = scmp.lt.s32.totalorder %s14, 3
      %p151 = pnand %p149, %p150
      %p152 = pneg %p151
      // Predicated region
      $region25: #{tpu_custom_call.1} parent=5 // pred_check
        _
      $region26: #{tpu_custom_call.1} parent=5 // pred_check_branch
        %154 = sbr.rel (%p151) target = $region28
      $region27: #{tpu_custom_call.1} parent=5 // pred_region
        %s155 = ssub.s32 %s14, 1
        %s156 = sand.u32 %s27, 1
        %s157 = scalar_lea.sflag [#allocation3], %s156
        %s158 = sand.u32 %s27, 1
        %s159 = smul.addr %s158, 8
        %s160 = scalar_lea.vmem [#allocation2], %s159
        // Predicated region
        $region29: #{tpu_custom_call.1} parent=27 // pred_check
          %p161 = pneg %p40
        $region30: #{tpu_custom_call.1} parent=27 // pred_check_branch
          %163 = sbr.rel (%p161) target = $region32
        $region31: #{tpu_custom_call.1} parent=27 // pred_region
          %165 = dma.done %s157, 128
        $region32: #{tpu_custom_call.1} parent=27 // pred_fallthru
          _
        %s166 = sand.u32 %s53, 1
        %s167 = scalar_lea.sflag [#allocation5], %s166
        %s168 = sand.u32 %s53, 1
        %s169 = smul.addr %s168, 8
        %s170 = scalar_lea.vmem [#allocation4], %s169
        // Predicated region
        $region33: #{tpu_custom_call.1} parent=27 // pred_check
          %p171 = pneg %p66
        $region34: #{tpu_custom_call.1} parent=27 // pred_check_branch
          %173 = sbr.rel (%p171) target = $region36
        $region35: #{tpu_custom_call.1} parent=27 // pred_region
          %175 = dma.done %s167, 128
        $region36: #{tpu_custom_call.1} parent=27 // pred_fallthru
          _
        %s176 = sand.u32 %s27, 1
        %s177 = scalar_lea.sflag [#allocation3], %s176
        %s178 = sand.u32 %s27, 1
        %s179 = smul.addr %s178, 8
        %s180 = scalar_lea.vmem [#allocation2], %s179
        %p181 = pneg %p40
        %p182 = pneg %p37
        %s183 = sand.u32 %s53, 1
        %s184 = scalar_lea.sflag [#allocation5], %s183
        %s185 = sand.u32 %s53, 1
        %s186 = smul.addr %s185, 8
        %s187 = scalar_lea.vmem [#allocation4], %s186
        %p188 = pneg %p66
        %p189 = pneg %p63
        %p190 = pneg %p92
        %p191 = pneg %p89
        %p192 = scmp.lt.s32.totalorder %s19, 1
        %s193 = scalar_select %p192, %s19, 1
        %s194 = scalar_lea.vmem %s2, %s193
        %p195 = scmp.lt.s32.totalorder %s19, 1
        %s196 = scalar_select %p195, %s19, 1
        %s197 = scalar_lea.vmem %s2, %s196
        %v198 = vld [vmem:[%s160] sm:$0xff]
        %v199 = vld [vmem:[%s170] sm:$0xff]
        %v200 = vsub.f32 %v198, %v199
        %v201 = vmul.f32 %v200, %v200
        %vm202 = vcmask 261120
        %v203 = vsel %vm202, %v201, 0.0
        %204 = vadd.xlane.f32.xlu0 %v203
        %v205 = vpop.xlane.xlu0 %204
        %vm206 = vcmask 7168
        %v207 = vsel %vm206, %v205, 0.0
        %208 = vadd.xlane.f32.xlu0 %v207
        %v209 = vpop.xlane.xlu0 %208
        %v210 = vrot.slane %v209, 4
        %v211 = vadd.f32 %v209, %v210
        %v212 = vrot.slane %v211, 2
        %v213 = vadd.f32 %v211, %v212
        %v214 = vrot.slane %v213, 1
        %v215 = vadd.f32 %v213, %v214
        %s216 = vtos %v215
        %v217 = vstv %s216
        %vm218 = vcmask 0
        %219 = vst.msk [vmem:[%s197] sm:$0x1] %vm218, %v217
        %p220 = scmp.lt.s32.totalorder %s19, 1
        %s221 = scalar_select %p220, %s19, 1
        %s222 = scalar_lea.vmem %s2, %s221
        // Predicated region
        $region37: #{tpu_custom_call.1} parent=27 // pred_check
          %p223 = pneg %p89
        $region38: #{tpu_custom_call.1} parent=27 // pred_check_branch
          %225 = sbr.rel (%p223) target = $region40
        $region39: #{tpu_custom_call.1} parent=27 // pred_region
          _
        $region40: #{tpu_custom_call.1} parent=27 // pred_fallthru
          _
      $region28: #{tpu_custom_call.1} parent=5 // pred_fallthru
        _
      %p226 = scmp.le.s32.totalorder 2, %s14
      // Predicated region
      $region41: #{tpu_custom_call.1} parent=5 // pred_check
        %p227 = pneg %p226
      $region42: #{tpu_custom_call.1} parent=5 // pred_check_branch
        %229 = sbr.rel (%p227) target = $region44
      $region43: #{tpu_custom_call.1} parent=5 // pred_region
        %s230 = ssub.s32 %s14, 2
        // Predicated region
        $region45: #{tpu_custom_call.1} parent=43 // pred_check
          %p231 = pneg %p95
        $region46: #{tpu_custom_call.1} parent=43 // pred_check_branch
          %233 = sbr.rel (%p231) target = $region48
        $region47: #{tpu_custom_call.1} parent=43 // pred_region
          %p234 = scmp.lt.s32.totalorder %s20, 1
          %s235 = scalar_select %p234, %s20, 1
          %s236 = scalar_lea.vmem %s2, %s235
        $region48: #{tpu_custom_call.1} parent=43 // pred_fallthru
          _
      $region44: #{tpu_custom_call.1} parent=5 // pred_fallthru
        _
    $region6: #{tpu_custom_call.1} parent=1 // loop_footer
      %s18 = sadd.s32 1, %s14
    $region7: #{tpu_custom_call.1} parent=1 // loop_footer_branch
      %13 = sbr.rel target = $region3
    $region8: #{tpu_custom_call.1} parent=1 // loop_exit
      _
    %237 = vsyncpa [#allocation3], 1
    %s238 = scalar_lea.sflag [#allocation3], 1
    %239 = vsyncpa %s238, 1
    %240 = vsyncpa [#allocation5], 1
    %s241 = scalar_lea.sflag [#allocation5], 1
    %242 = vsyncpa %s241, 1

</llo_original>
